<compile_context>
chip_gen: v7x
topology: tpu7x:2x2x1
jax: 0.10.0
libtpu: 0.0.40
codegen_flags: <defaults>
</compile_context>

<pallas_src>
import jax
import jax.numpy as jnp
from jax import lax
from jax.experimental import pallas as pl
from jax.experimental.pallas import tpu as pltpu

_LANE = 128
_SUBLANE = 8
_TM_MAX = 1024                      # upper bound on the row tile
_VMEM_TILE_BUDGET = 24 * 1024 * 1024  # target bytes for tiles + resident weight
_VMEM_LIMIT = 48 * 1024 * 1024        # scoped VMEM limit (fits every generation)


def _round_up(x, m):
    return ((x + m - 1) // m) * m


def _dense_kernel(x_ref, w_ref, b_ref, o_ref):
    # x_ref: (TM, Cin_p)   w_ref: (Cout_p, Cin_p)  [VMEM-resident across steps]
    # b_ref: (1, Cout_p)   o_ref: (TM, Cout_p)
    # Contract x's last dim with weight's last dim (x @ W.T) on the MXU.
    y = lax.dot_general(
        x_ref[...], w_ref[...],
        dimension_numbers=(((1,), (1,)), ((), ())),
        preferred_element_type=jnp.float32,
    )
    y = y + b_ref[...].astype(jnp.float32)       # f32 epilogue
    o_ref[...] = jnp.maximum(y, 0.0).astype(o_ref.dtype)


def _choose_tm(m_pad8, cin_p, cout_p, in_bytes, out_bytes):
    """Largest row tile (multiple of 8) keeping double-buffered tiles + resident
    weight under the VMEM budget."""
    weight_bytes = 2 * cin_p * cout_p * in_bytes          # (double-buffer alloc)
    per_row = 2 * cin_p * in_bytes + 2 * cout_p * out_bytes
    avail = max(_VMEM_TILE_BUDGET - weight_bytes, per_row * _SUBLANE)
    tm = avail // per_row
    tm = max(_SUBLANE, min(int(tm), _TM_MAX, m_pad8))
    return (tm // _SUBLANE) * _SUBLANE


def dense_forward(x, weight, bias, *, compute_dtype=None):
    """x: (..., in_features); weight: (out_features, in_features); bias: (out_features,).

    compute_dtype: optionally cast x/W (e.g. jnp.bfloat16 on v6e/v7x) for the
    matmul; accumulation, bias-add and ReLU stay in f32, output keeps x.dtype.
    """
    out_dtype = x.dtype
    cout, cin = weight.shape
    lead_shape = x.shape[:-1]
    m = 1
    for d in lead_shape:
        m *= int(d)
    m = max(m, 1)

    cin_p = _round_up(cin, _LANE)
    cout_p = _round_up(cout, _LANE)

    x2d = x.reshape(m, cin)
    w = weight
    if compute_dtype is not None:
        x2d = x2d.astype(compute_dtype)
        w = w.astype(compute_dtype)

    in_bytes = jnp.dtype(x2d.dtype).itemsize
    out_bytes = jnp.dtype(out_dtype).itemsize

    m_pad8 = _round_up(m, _SUBLANE)
    tm = _choose_tm(m_pad8, cin_p, cout_p, in_bytes, out_bytes)
    m_pad = _round_up(m, tm)

    # Zero-pad to aligned shapes (lane-dense output, 128-aligned contraction).
    # Zero rows/cols contribute nothing to the dot product and are sliced off.
    # NOTE: in a real model the weight/bias would be stored pre-padded once.
    x2d = jnp.pad(x2d, ((0, m_pad - m), (0, cin_p - cin)))
    w = jnp.pad(w, ((0, cout_p - cout), (0, cin_p - cin)))
    b2d = jnp.pad(bias, (0, cout_p - cout)).reshape(1, cout_p)

    grid = (m_pad // tm,)

    cost = pl.CostEstimate(
        flops=2 * m_pad * cin_p * cout_p,
        transcendentals=0,
        bytes_accessed=(m_pad * cin_p * in_bytes
                        + cin_p * cout_p * in_bytes
                        + cout_p * 4
                        + m_pad * cout_p * out_bytes),
    )

    out2d = pl.pallas_call(
        _dense_kernel,
        out_shape=jax.ShapeDtypeStruct((m_pad, cout_p), out_dtype),
        grid_spec=pltpu.PrefetchScalarGridSpec(
            num_scalar_prefetch=0,
            grid=grid,
            in_specs=[
                pl.BlockSpec((tm, cin_p), lambda i: (i, 0)),       # streamed x rows
                pl.BlockSpec((cout_p, cin_p), lambda i: (0, 0)),   # resident weight
                pl.BlockSpec((1, cout_p), lambda i: (0, 0)),       # resident bias
            ],
            out_specs=pl.BlockSpec((tm, cout_p), lambda i: (i, 0)),
        ),
        compiler_params=pltpu.CompilerParams(
            dimension_semantics=("parallel",),
            vmem_limit_bytes=_VMEM_LIMIT,
        ),
        cost_estimate=cost,
    )(x2d, w, b2d)

    return out2d[:m, :cout].reshape(*lead_shape, cout)


def _reference(x, weight, bias):
    return jnp.maximum(jnp.einsum("...i,oi->...o", x, weight) + bias, 0.0)


def _make_params(key, in_features, out_features):
    k_w, k_b = jax.random.split(key)
    bound = 1.0 / (in_features ** 0.5)
    weight = jax.random.uniform(k_w, (out_features, in_features),
                                minval=-bound, maxval=bound, dtype=jnp.float32)
    bias = jax.random.uniform(k_b, (out_features,),
                              minval=-bound, maxval=bound, dtype=jnp.float32)
    return weight, bias


if __name__ == "__main__":
    key = jax.random.PRNGKey(0)
    k_x1, k_p1, k_x2, k_p2 = jax.random.split(key, 4)

    # Case 1: small PointNet-like shapes, C aligned below lane width.
    batch, npts, cin, cout = 2, 8, 32, 32
    w1, b1 = _make_params(k_p1, cin, cout)
    x1 = jax.random.normal(k_x1, (batch, npts, cin), dtype=jnp.float32)
    out1 = jax.block_until_ready(dense_forward(x1, w1, b1))
    ref1 = _reference(x1, w1, b1)
    assert out1.shape == (batch, npts, cout)
    assert jnp.allclose(out1, ref1, atol=1e-5, rtol=1e-5)

    # Case 2: un-aligned rows / channels to exercise the pad + slice path.
    batch2, npts2, cin2, cout2 = 2, 10, 48, 96
    w2, b2 = _make_params(k_p2, cin2, cout2)
    x2 = jax.random.normal(k_x2, (batch2, npts2, cin2), dtype=jnp.float32)
    out2 = jax.block_until_ready(dense_forward(x2, w2, b2))
    ref2 = _reference(x2, w2, b2)
    assert out2.shape == (batch2, npts2, cout2)
    assert jnp.allclose(out2, ref2, atol=1e-5, rtol=1e-5)

    print("KERNEL_OK")
</pallas_src>

<mosaic_0001>
module attributes {stable_mosaic.version = 11 : i64} {
  func.func @_dense_kernel(%arg0: i32, %arg1: memref<16x128xf32, #tpu.memory_space<vmem>>, %arg2: memref<128x128xf32, #tpu.memory_space<vmem>>, %arg3: memref<1x128xf32, #tpu.memory_space<vmem>>, %arg4: memref<16x128xf32, #tpu.memory_space<vmem>>) attributes {dimension_semantics = [#tpu.dimension_semantics<parallel>], iteration_bounds = array<i64: 1>, scalar_prefetch = 0 : i64, scratch_operands = 0 : i64, tpu.core_type = #tpu.core_type<tc>, window_params = [{transform_indices = @transform_0, window_bounds = array<i64: 16, 128>}, {pipeline_mode = #tpu.pipeline_mode<synchronous>, transform_indices = @transform_1, window_bounds = array<i64: 128, 128>}, {pipeline_mode = #tpu.pipeline_mode<synchronous>, transform_indices = @transform_2, window_bounds = array<i64: 1, 128>}, {transform_indices = @transform_3, window_bounds = array<i64: 16, 128>}]} {
    %c0 = arith.constant 0 : index
    %c0_0 = arith.constant 0 : index
    %0 = vector.load %arg1[%c0, %c0_0] : memref<16x128xf32, #tpu.memory_space<vmem>>, vector<16x128xf32>
    %c0_1 = arith.constant 0 : index
    %c0_2 = arith.constant 0 : index
    %1 = vector.load %arg2[%c0_1, %c0_2] : memref<128x128xf32, #tpu.memory_space<vmem>>, vector<128x128xf32>
    %cst = arith.constant dense<0.000000e+00> : vector<16x128xf32>
    %2 = tpu.matmul %0, %1, %cst {dimension_numbers = #tpu.dot_dimension_numbers<[1], [1], [0], [0], [0, 0, 1, 0], [], []>} : vector<16x128xf32>, vector<128x128xf32>, vector<16x128xf32> -> vector<16x128xf32>
    %c0_3 = arith.constant 0 : index
    %c0_4 = arith.constant 0 : index
    %3 = vector.load %arg3[%c0_3, %c0_4] : memref<1x128xf32, #tpu.memory_space<vmem>>, vector<1x128xf32>
    %4 = vector.broadcast %3 : vector<1x128xf32> to vector<16x128xf32>
    %5 = arith.addf %2, %4 : vector<16x128xf32>
    %cst_5 = arith.constant 0.000000e+00 : f32
    %6 = vector.broadcast %cst_5 : f32 to vector<16x128xf32>
    %7 = arith.maximumf %5, %6 : vector<16x128xf32>
    %c0_6 = arith.constant 0 : index
    %c0_7 = arith.constant 0 : index
    %8 = vector.load %arg4[%c0_6, %c0_7] : memref<16x128xf32, #tpu.memory_space<vmem>>, vector<16x128xf32>
    tpu.vector_store %arg4[%c0_6, %c0_7], %7 {strides = array<i32>} : memref<16x128xf32, #tpu.memory_space<vmem>>, vector<16x128xf32>,
    return
  }
  func.func @transform_0(%arg0: i32) -> (i32, i32) {
    %c0_i32 = arith.constant 0 : i32
    %c0_i32_0 = arith.constant 0 : i32
    return %arg0, %c0_i32 : i32, i32
  }
  func.func @transform_1(%arg0: i32) -> (i32, i32) {
    %c0_i32 = arith.constant 0 : i32
    %c0_i32_0 = arith.constant 0 : i32
    %c0_i32_1 = arith.constant 0 : i32
    return %c0_i32, %c0_i32_0 : i32, i32
  }
  func.func @transform_2(%arg0: i32) -> (i32, i32) {
    %c0_i32 = arith.constant 0 : i32
    %c0_i32_0 = arith.constant 0 : i32
    %c0_i32_1 = arith.constant 0 : i32
    return %c0_i32, %c0_i32_0 : i32, i32
  }
  func.func @transform_3(%arg0: i32) -> (i32, i32) {
    %c0_i32 = arith.constant 0 : i32
    %c0_i32_0 = arith.constant 0 : i32
    return %arg0, %c0_i32 : i32, i32
  }
}

</mosaic_0001>

<llo_original>
// kernel: tpu_custom_call.1
$region0: #{tpu_custom_call.1}
  #allocation0 [shape = 'u32[]', space=smem, size = 0x4, offset = 0x4, fixed_abs, tag = 'smem constant byte address 0x4 - core index']
  #allocation1 [shape = 'u32[144,128]{1,0:T(1,128)}', space=vmem, size = 0x12000, scoped, tag = 'internal scratch']
  %s0 = inlined_call_operand.hbm [shape: f32[16,128], index: 0, kind: input, shape index: {}]
  %s1 = inlined_call_operand.hbm [shape: f32[128,128], index: 1, kind: input, shape index: {}]
  %s2 = inlined_call_operand.vmem [shape: f32[1,128], index: 2, kind: input, shape index: {}]
  %s3 = inlined_call_operand.hbm [shape: f32[16,128], index: 3, kind: output, shape index: {}]
  %s4 = sld [smem:[#allocation0]]
  $region30: #{tpu_custom_call.1} parent=0
    _
  %s6 = ssub.s32 1, %s4
  %s7 = scalar_select 0, %s6, %s4
  $region1: #{tpu_custom_call.1} parent=0
    #allocation2 [shape = 'u8[8192]{0}', space=vmem, size = 0x2000, scoped, tag = 'input window, operand 0, single buffered']
    #allocation3 [shape = 's32[1]{0}', space=sflag, size = 0x4, scoped, tag = 'scoped memory for tpu_custom_call.1']
    #allocation4 [shape = 's32[1]{0}', space=sflag, size = 0x4, scoped, tag = 'scoped memory for tpu_custom_call.1']
    #allocation5 [shape = 'u8[65536]{0}', space=vmem, size = 0x10000, scoped, tag = 'input window, operand 1, single buffered']
    #allocation6 [shape = 's32[1]{0}', space=sflag, size = 0x4, scoped, tag = 'scoped memory for tpu_custom_call.1']
    #allocation7 [shape = 'u8[8192]{0}', space=vmem, size = 0x2000, scoped, tag = 'output window, operand 0, single buffered']
    %8 = vsyncpa [#allocation3], 0
    %9 = vsyncpa [#allocation6], 0
    %10 = vsyncpa [#allocation4], 0
    // Predicated region
    $region2: #{tpu_custom_call.1} parent=1 // pred_check
      _
    $region3: #{tpu_custom_call.1} parent=1 // pred_check_branch
      %12 = sbr.rel (0) target = $region5
    $region4: #{tpu_custom_call.1} parent=1 // pred_region
      %s14 = ssub.s32 256, 256
      %15 = vsyncadd [#allocation3], %s14
      %s16 = sshll.u32 [#allocation2], 4
      %s17 = int_to_ptr.vmem [resolvable:$true] %s16
      %22 = dma.hbm_to_vmem [thread:$0]  %s0, 256, %s17, [#allocation3], 128, 128, 8
    $region5: #{tpu_custom_call.1} parent=1 // pred_fallthru
      _
    // Predicated region
    $region6: #{tpu_custom_call.1} parent=1 // pred_check
      _
    $region7: #{tpu_custom_call.1} parent=1 // pred_check_branch
      %24 = sbr.rel (0) target = $region9
    $region8: #{tpu_custom_call.1} parent=1 // pred_region
      %s26 = ssub.s32 2048, 2048
      %27 = vsyncadd [#allocation6], %s26
      %s28 = sshll.u32 [#allocation5], 4
      %s29 = int_to_ptr.vmem [resolvable:$true] %s28
      %34 = dma.hbm_to_vmem [thread:$0]  %s1, 2048, %s29, [#allocation6], 128, 128, 8
    $region9: #{tpu_custom_call.1} parent=1 // pred_fallthru
      _
    // Predicated region
    $region10: #{tpu_custom_call.1} parent=1 // pred_check
      _
    $region11: #{tpu_custom_call.1} parent=1 // pred_check_branch
      %36 = sbr.rel (0) target = $region13
    $region12: #{tpu_custom_call.1} parent=1 // pred_region
      _
    $region13: #{tpu_custom_call.1} parent=1 // pred_fallthru
      _
    // Predicated region
    $region14: #{tpu_custom_call.1} parent=1 // pred_check
      _
    $region15: #{tpu_custom_call.1} parent=1 // pred_check_branch
      %38 = sbr.rel (0) target = $region17
    $region16: #{tpu_custom_call.1} parent=1 // pred_region
      %39 = dma.done [#allocation3], 256
    $region17: #{tpu_custom_call.1} parent=1 // pred_fallthru
      _
    // Predicated region
    $region18: #{tpu_custom_call.1} parent=1 // pred_check
      _
    $region19: #{tpu_custom_call.1} parent=1 // pred_check_branch
      %41 = sbr.rel (0) target = $region21
    $region20: #{tpu_custom_call.1} parent=1 // pred_region
      %42 = dma.done [#allocation6], 2048
    $region21: #{tpu_custom_call.1} parent=1 // pred_fallthru
      _
    %v43 = vld [vmem:[#allocation2] sm:$0xff]
    %v44 = vld [vmem:[#allocation2 + $0x8] sm:$0xff]
    %v45 = vld [vmem:[#allocation5] sm:$0xff]
    %v46 = vld [vmem:[#allocation5 + $0x8] sm:$0xff]
    %v47 = vld [vmem:[#allocation5 + $0x10] sm:$0xff]
    %v48 = vld [vmem:[#allocation5 + $0x18] sm:$0xff]
    %v49 = vld [vmem:[#allocation5 + $0x20] sm:$0xff]
    %v50 = vld [vmem:[#allocation5 + $0x28] sm:$0xff]
    %v51 = vld [vmem:[#allocation5 + $0x30] sm:$0xff]
    %v52 = vld [vmem:[#allocation5 + $0x38] sm:$0xff]
    %v53 = vld [vmem:[#allocation5 + $0x40] sm:$0xff]
    %v54 = vld [vmem:[#allocation5 + $0x48] sm:$0xff]
    %v55 = vld [vmem:[#allocation5 + $0x50] sm:$0xff]
    %v56 = vld [vmem:[#allocation5 + $0x58] sm:$0xff]
    %v57 = vld [vmem:[#allocation5 + $0x60] sm:$0xff]
    %v58 = vld [vmem:[#allocation5 + $0x68] sm:$0xff]
    %v59 = vld [vmem:[#allocation5 + $0x70] sm:$0xff]
    %v60 = vld [vmem:[#allocation5 + $0x78] sm:$0xff]
    %v61 = vld [vmem:[%s2] sm:$0x1]
    %v63 = vlaneseq
    %v64 = vshrl.u32 %v63, 7
    %v65 = vsub.s32 0, %v64
    %v66 = vrot.slane %v61, %v65
    %68 = vmatprep.subr.mxu0 0.0
    %69 = vmatpush1.xpose.msra.mxu0 %v45
    %70 = vmatprep.subr.mxu0 0.0
    %71 = vmatpush1.xpose.msra.mxu0 %v46
    %72 = vmatprep.subr.mxu0 0.0
    %73 = vmatpush1.xpose.msra.mxu0 %v47
    %74 = vmatprep.subr.mxu0 0.0
    %75 = vmatpush1.xpose.msra.mxu0 %v48
    %76 = vmatprep.subr.mxu0 0.0
    %77 = vmatpush1.xpose.msra.mxu0 %v49
    %78 = vmatprep.subr.mxu0 0.0
    %79 = vmatpush1.xpose.msra.mxu0 %v50
    %80 = vmatprep.subr.mxu0 0.0
    %81 = vmatpush1.xpose.msra.mxu0 %v51
    %82 = vmatprep.subr.mxu0 0.0
    %83 = vmatpush1.xpose.msra.mxu0 %v52
    %84 = vmatprep.subr.mxu0 0.0
    %85 = vmatpush1.xpose.msra.mxu0 %v53
    %86 = vmatprep.subr.mxu0 0.0
    %87 = vmatpush1.xpose.msra.mxu0 %v54
    %88 = vmatprep.subr.mxu0 0.0
    %89 = vmatpush1.xpose.msra.mxu0 %v55
    %90 = vmatprep.subr.mxu0 0.0
    %91 = vmatpush1.xpose.msra.mxu0 %v56
    %92 = vmatprep.subr.mxu0 0.0
    %93 = vmatpush1.xpose.msra.mxu0 %v57
    %94 = vmatprep.subr.mxu0 0.0
    %95 = vmatpush1.xpose.msra.mxu0 %v58
    %96 = vmatprep.subr.mxu0 0.0
    %97 = vmatpush1.xpose.msra.mxu0 %v59
    %98 = vmatprep.subr.mxu0 0.0
    %99 = vmatpush1.xpose.msra.mxu0 %v60
    %100 = vmatprep.subr.mxu0 0.0
    %101 = vmatpush1.xpose.msra.mxu0 0.0
    %102 = vmatprep.subr.mxu0 0.0
    %103 = vmatpush1.xpose.msra.mxu0 0.0
    %104 = vmatprep.subr.mxu0 0.0
    %105 = vmatpush1.xpose.msra.mxu0 0.0
    %106 = vmatprep.subr.mxu0 0.0
    %107 = vmatpush1.xpose.msra.mxu0 0.0
    %108 = vmatprep.subr.mxu0 0.0
    %109 = vmatpush1.xpose.msra.mxu0 0.0
    %110 = vmatprep.subr.mxu0 0.0
    %111 = vmatpush1.xpose.msra.mxu0 0.0
    %112 = vmatprep.subr.mxu0 0.0
    %113 = vmatpush1.xpose.msra.mxu0 0.0
    %114 = vmatprep.subr.mxu0 0.0
    %115 = vmatpush1.xpose.msra.mxu0 0.0
    %116 = vmatprep.subr.mxu0 0.0
    %117 = vmatpush1.xpose.msra.mxu0 0.0
    %118 = vmatprep.subr.mxu0 0.0
    %119 = vmatpush1.xpose.msra.mxu0 0.0
    %120 = vmatprep.subr.mxu0 0.0
    %121 = vmatpush1.xpose.msra.mxu0 0.0
    %122 = vmatprep.subr.mxu0 0.0
    %123 = vmatpush1.xpose.msra.mxu0 0.0
    %124 = vmatprep.subr.mxu0 0.0
    %125 = vmatpush1.xpose.msra.mxu0 0.0
    %126 = vmatprep.subr.mxu0 0.0
    %127 = vmatpush1.xpose.msra.mxu0 0.0
    %128 = vmatprep.subr.mxu0 0.0
    %129 = vmatpush1.xpose.msra.mxu0 0.0
    %130 = vmatprep.subr.mxu0 0.0
    %131 = vmatpush1.xpose.msra.mxu0 0.0
    %132 = vmatprep.mubr.f32.mxu0 0.0
    %133 = vmatmul.mubr.f32.gmra.mrb[0].mxu0 %v43
    %v134 = vpop.f32.mrb[0].mxu0
    %v135 = vadd.f32 %v66, %v134
    %v136 = vpop.f32.mrb[0].mxu0
    %137 = vmatprep.mubr.f32.mxu0 0.0
    %138 = vmatmul.mubr.f32.gmra.mrb[0].mxu0 %v44
    %v139 = vpop.f32.mrb[0].mxu0
    %v140 = vadd.f32 %v66, %v139
    %v141 = vpop.f32.mrb[0].mxu0
    %142 = vdwg.mxu0
    %v143 = vmax.f32 %v135, 0.0
    %v144 = vmax.f32 %v140, 0.0
    %145 = vst [vmem:[#allocation7] sm:$0xff] %v143
    %146 = vst [vmem:[#allocation7 + $0x8] sm:$0xff] %v144
    // Predicated region
    $region22: #{tpu_custom_call.1} parent=1 // pred_check
      _
    $region23: #{tpu_custom_call.1} parent=1 // pred_check_branch
      %148 = sbr.rel (0) target = $region25
    $region24: #{tpu_custom_call.1} parent=1 // pred_region
      %s150 = ssub.s32 256, 256
      %151 = vsyncadd [#allocation4], %s150
      %s152 = sshll.u32 [#allocation7], 4
      %s153 = int_to_ptr.vmem [resolvable:$true] %s152
      %158 = dma.vmem_to_hbm [thread:$0]  %s153, 256, %s3, [#allocation4], 128, 128, 8
    $region25: #{tpu_custom_call.1} parent=1 // pred_fallthru
      _
    // Predicated region
    $region26: #{tpu_custom_call.1} parent=1 // pred_check
      _
    $region27: #{tpu_custom_call.1} parent=1 // pred_check_branch
      %160 = sbr.rel (0) target = $region29
    $region28: #{tpu_custom_call.1} parent=1 // pred_region
      %161 = dma.done [#allocation4], 256
    $region29: #{tpu_custom_call.1} parent=1 // pred_fallthru
      _
    %162 = vsyncpa [#allocation3], 1
    %163 = vsyncpa [#allocation6], 1
    %164 = vsyncpa [#allocation4], 1

</llo_original>
